<compile_context>
chip_gen: v5e
topology: v5e:2x2
jax: 0.10.0
libtpu: 0.0.40
codegen_flags: <defaults>
</compile_context>

<pallas_src>
import numpy as np
import jax
import jax.numpy as jnp
from jax.experimental import pallas as pl
from jax.experimental.pallas import tpu as pltpu


# ----------------------------------------------------------------------------
# Setup glue (matches ToeplitzMatmul.__init__): gram row -> circulant embed ->
# eigenvalues D0 -> precomposed dense operator G^T.  Runs once, off the hot
# path, so it uses NumPy/JAX host code (double-precision FFTs).
# ----------------------------------------------------------------------------
def rbf_kernel(x1, x2, lengthscale=0.5):
    # x1: (1, d), x2: (N, d) -> (N,)
    d2 = jnp.sum((x1 - x2) ** 2, axis=-1)
    return jnp.exp(-0.5 * d2 / (lengthscale ** 2))


def toeplitz_gram(xgrids, kernel):
    dims = [len(xg) for xg in xgrids]
    xxs = jnp.meshgrid(*xgrids, indexing="ij")
    xs = jnp.stack([x.reshape(-1) for x in xxs], axis=-1)
    Krow = kernel(xs[0][None, :], xs)
    return Krow.reshape(dims)


def circulant_embed(Ktoe):
    dims = Ktoe.shape
    for d in range(len(dims)):
        Krev = jnp.flip(Ktoe, axis=d)
        idx = [slice(None)] * d + [slice(1, -1)]
        Krev = Krev[tuple(idx)]
        Ktoe = jnp.concatenate([Ktoe, Krev], axis=d)
    return Ktoe


def circulant_eigenvalues(C):
    """D0 = clamp(Re(FFT_n(C)), min=1e-6)  (torch.fft + clamp in __init__)."""
    C_np = np.asarray(C, dtype=np.float64)
    D0 = np.maximum(np.real(np.fft.fftn(C_np)), 1e-6)
    return jnp.asarray(D0, dtype=jnp.float32)


def build_gram_operator(D0, dims):
    """Precompose  crop . Re . IFFT . (D0*) . FFT . pad  into a dense matrix.

    Returns GT (M, M) float32 such that  out = vec @ GT  equals the 'gram'
    multiply K @ v applied row-wise to vec (GT = G^T where op(x) = G x).
    """
    dims = tuple(int(d) for d in dims)
    M = int(np.prod(dims))
    D0_np = np.asarray(D0, dtype=np.float64)
    axes = tuple(range(1, len(dims) + 1))
    crop = (slice(None),) + tuple(slice(0, d) for d in dims)
    eye = np.eye(M, dtype=np.float64).reshape((M,) + dims)
    padded = np.zeros((M,) + D0_np.shape, dtype=np.complex128)
    padded[crop] = eye
    spec = D0_np[None] * np.fft.fftn(padded, axes=axes)
    GT = np.real(np.fft.ifftn(spec, axes=axes))[crop].reshape(M, M)
    return jnp.asarray(GT, dtype=jnp.float32)
# TODO(synk): 'RTv' / 'Rv' / 'circ_inv' multiply types precompose the same way
# (sqrt(D0) / 1/D0 eigenvalues, different pad/crop) and would reuse the same
# kernel; only 'gram' is wired up.  For very large M (>~4k) the dense operator
# should be swapped for a batched factorized-DFT kernel.


# ----------------------------------------------------------------------------
# Pallas kernel: one lane-dense batched matmul per batch tile.
# ----------------------------------------------------------------------------
def _gram_matmul_kernel(v_ref, gt_ref, o_ref):
    # v_ref : (TB, M)   batch tile of input vectors (compute dtype)
    # gt_ref: (M, Mp)   grid-invariant precomposed operator G^T, zero-padded to
    #                   Mp = round_up(M, 128) so output stores are unmasked
    #                   128-lane vst's (lane-dense).
    # o_ref : (TB, Mp)  float32 output tile (cropped back to M in the wrapper)
    o_ref[...] = jnp.dot(v_ref[...], gt_ref[...],
                         preferred_element_type=jnp.float32)


def _round_up(x, m):
    return ((x + m - 1) // m) * m


def toeplitz_matmul_gram(vec, D0, dims, *, compute_dtype=jnp.bfloat16,
                         batch_tile=256):
    """Pallas implementation of ToeplitzMatmul.forward(vec, 'gram').

    vec : (bsz, M) float32, M = prod(dims)
    D0  : circulant eigenvalue plane, shape tuple(2*d - 2 for d in dims)
    returns (bsz, M) float32
    """
    bsz, M = vec.shape
    assert M == int(np.prod(dims))

    # Precomposed operator, zero-padded to a lane-dense output width.
    GT = build_gram_operator(D0, dims)                         # (M, M) f32
    Mp = _round_up(max(M, 128), 128)
    GTp = jnp.zeros((M, Mp), jnp.float32).at[:, :M].set(GT)
    GTp = GTp.astype(compute_dtype)

    # Batch tiling: TB vectors per grid step (multiple of 8 sublanes).
    tb = min(batch_tile, _round_up(bsz, 8))
    bsz_p = _round_up(bsz, tb)
    vp = jnp.zeros((bsz_p, M), compute_dtype).at[:bsz].set(
        vec.astype(compute_dtype))

    grid = (bsz_p // tb,)
    itemsize = np.dtype(compute_dtype).itemsize
    cost = pl.CostEstimate(
        flops=2 * bsz_p * M * Mp,
        transcendentals=0,
        bytes_accessed=(bsz_p * M + M * Mp) * itemsize + bsz_p * Mp * 4)

    out = pl.pallas_call(
        _gram_matmul_kernel,
        out_shape=jax.ShapeDtypeStruct((bsz_p, Mp), jnp.float32),
        grid=grid,
        in_specs=[
            pl.BlockSpec((tb, M), lambda b: (b, 0)),   # streamed batch tile
            pl.BlockSpec((M, Mp), lambda b: (0, 0)),   # grid-invariant G^T
        ],
        out_specs=pl.BlockSpec((tb, Mp), lambda b: (b, 0)),
        compiler_params=pltpu.CompilerParams(
            dimension_semantics=("parallel",)),
        cost_estimate=cost,
    )(vp, GTp)

    return out[:bsz, :M]


# ----------------------------------------------------------------------------
if __name__ == "__main__":
    # Small deterministic problem: 2-D grid (8 x 8), M = 64, batch = 2.
    n1, n2 = 8, 8
    dims = (n1, n2)
    bsz = 2

    xgrids = [jnp.linspace(0.0, 1.0, n1, dtype=jnp.float32),
              jnp.linspace(0.0, 1.0, n2, dtype=jnp.float32)]

    # __init__ equivalent: K -> circulant embed C -> eigenvalues D0.
    K = toeplitz_gram(xgrids, rbf_kernel)          # (n1, n2)
    C = circulant_embed(K)                         # (2*n1-2, 2*n2-2)
    D0 = circulant_eigenvalues(C)                  # (P1, P2)

    key = jax.random.PRNGKey(0)
    vec = jax.random.normal(key, (bsz, n1 * n2), dtype=jnp.float32)

    # Run the kernel: bf16 fast path (default) + f32 path for a tight check.
    out_bf16 = jax.block_until_ready(
        toeplitz_matmul_gram(vec, D0, dims, compute_dtype=jnp.bfloat16))
    out_f32 = jax.block_until_ready(
        toeplitz_matmul_gram(vec, D0, dims, compute_dtype=jnp.float32))

    # Reference: the plain FFT path, mirroring the PyTorch 'gram' forward.
    D0_np = np.asarray(D0, dtype=np.float64)
    padded = np.zeros((bsz,) + D0.shape, dtype=np.complex128)
    padded[:, :n1, :n2] = np.asarray(vec, dtype=np.float64).reshape(bsz, n1, n2)
    ref = np.real(np.fft.ifftn(D0_np[None] * np.fft.fftn(padded, axes=(1, 2)),
                               axes=(1, 2)))[:, :n1, :n2].reshape(bsz, -1)
    ref = jnp.asarray(ref, dtype=jnp.float32)

    assert out_f32.shape == (bsz, n1 * n2)
    assert out_bf16.shape == (bsz, n1 * n2)
    err_f32 = float(jnp.max(jnp.abs(out_f32 - ref)))
    err_bf16 = float(jnp.max(jnp.abs(out_bf16 - ref)))
    assert jnp.allclose(out_f32, ref, atol=1e-3, rtol=1e-3), err_f32
    assert jnp.allclose(out_bf16, ref, atol=1e-1, rtol=5e-2), err_bf16
    print("KERNEL_OK")
</pallas_src>

<mosaic_0001>
module attributes {stable_mosaic.version = 11 : i64} {
  func.func @_gram_matmul_kernel(%arg0: i32, %arg1: memref<8x64xbf16, #tpu.memory_space<vmem>>, %arg2: memref<64x128xbf16, #tpu.memory_space<vmem>>, %arg3: memref<8x128xf32, #tpu.memory_space<vmem>>) attributes {dimension_semantics = [#tpu.dimension_semantics<parallel>], iteration_bounds = array<i64: 1>, scalar_prefetch = 0 : i64, scratch_operands = 0 : i64, tpu.core_type = #tpu.core_type<tc>, window_params = [{transform_indices = @transform_0, window_bounds = array<i64: 8, 64>}, {pipeline_mode = #tpu.pipeline_mode<synchronous>, transform_indices = @transform_1, window_bounds = array<i64: 64, 128>}, {transform_indices = @transform_2, window_bounds = array<i64: 8, 128>}]} {
    %c0 = arith.constant 0 : index
    %c0_0 = arith.constant 0 : index
    %0 = vector.load %arg1[%c0, %c0_0] : memref<8x64xbf16, #tpu.memory_space<vmem>>, vector<8x64xbf16>
    %c0_1 = arith.constant 0 : index
    %c0_2 = arith.constant 0 : index
    %1 = vector.load %arg2[%c0_1, %c0_2] : memref<64x128xbf16, #tpu.memory_space<vmem>>, vector<64x128xbf16>
    %cst = arith.constant dense<0.000000e+00> : vector<8x128xf32>
    %2 = tpu.matmul %0, %1, %cst {dimension_numbers = #tpu.dot_dimension_numbers<[1], [0], [0], [1], [0, 0, 1, 1], [], []>} : vector<8x64xbf16>, vector<64x128xbf16>, vector<8x128xf32> -> vector<8x128xf32>
    %c0_3 = arith.constant 0 : index
    %c0_4 = arith.constant 0 : index
    %3 = vector.load %arg3[%c0_3, %c0_4] : memref<8x128xf32, #tpu.memory_space<vmem>>, vector<8x128xf32>
    tpu.vector_store %arg3[%c0_3, %c0_4], %2 {strides = array<i32>} : memref<8x128xf32, #tpu.memory_space<vmem>>, vector<8x128xf32>,
    return
  }
  func.func @transform_0(%arg0: i32) -> (i32, i32) {
    %c0_i32 = arith.constant 0 : i32
    %c0_i32_0 = arith.constant 0 : i32
    return %arg0, %c0_i32 : i32, i32
  }
  func.func @transform_1(%arg0: i32) -> (i32, i32) {
    %c0_i32 = arith.constant 0 : i32
    %c0_i32_0 = arith.constant 0 : i32
    %c0_i32_1 = arith.constant 0 : i32
    return %c0_i32, %c0_i32_0 : i32, i32
  }
  func.func @transform_2(%arg0: i32) -> (i32, i32) {
    %c0_i32 = arith.constant 0 : i32
    %c0_i32_0 = arith.constant 0 : i32
    return %arg0, %c0_i32 : i32, i32
  }
}

</mosaic_0001>

<llo_original>
// kernel: tpu_custom_call.1
$region0: #{tpu_custom_call.1}
  #allocation0 [shape = 'u32[]', space=smem, size = 0x4, offset = 0x4, fixed_abs, tag = 'smem constant byte address 0x4 - core index']
  #allocation1 [shape = 'u32[72,128]{1,0:T(1,128)}', space=vmem, size = 0x9000, scoped, tag = 'internal scratch']
  %s0 = inlined_call_operand.hbm [shape: bf16[8,64], index: 0, kind: input, shape index: {}]
  %s1 = inlined_call_operand.hbm [shape: bf16[64,128], index: 1, kind: input, shape index: {}]
  %s2 = inlined_call_operand.hbm [shape: f32[8,128], index: 2, kind: output, shape index: {}]
  %s3 = sld [smem:[#allocation0]]
  $region26: #{tpu_custom_call.1} parent=0
    _
  %s5 = ssub.s32 1, %s3
  %s6 = scalar_select 0, %s5, %s3
  $region1: #{tpu_custom_call.1} parent=0
    #allocation2 [shape = 'u8[2048]{0}', space=vmem, size = 0x800, scoped, tag = 'input window, operand 0, single buffered']
    #allocation3 [shape = 's32[1]{0}', space=sflag, size = 0x4, scoped, tag = 'scoped memory for tpu_custom_call.1']
    #allocation4 [shape = 's32[1]{0}', space=sflag, size = 0x4, scoped, tag = 'scoped memory for tpu_custom_call.1']
    #allocation5 [shape = 'u8[16384]{0}', space=vmem, size = 0x4000, scoped, tag = 'input window, operand 1, single buffered']
    #allocation6 [shape = 's32[1]{0}', space=sflag, size = 0x4, scoped, tag = 'scoped memory for tpu_custom_call.1']
    #allocation7 [shape = 'u8[4096]{0}', space=vmem, size = 0x1000, scoped, tag = 'output window, operand 0, single buffered']
    %7 = vsyncpa [#allocation3], 0
    %8 = vsyncpa [#allocation6], 0
    %9 = vsyncpa [#allocation4], 0
    // Predicated region
    $region2: #{tpu_custom_call.1} parent=1 // pred_check
      _
    $region3: #{tpu_custom_call.1} parent=1 // pred_check_branch
      %11 = sbr.rel (0) target = $region5
    $region4: #{tpu_custom_call.1} parent=1 // pred_region
      %13 = vsyncadd [#allocation3], 0
      %s15 = sshll.u32 %s0, 4
      %s16 = int_to_ptr.hbm [resolvable:$true] %s15
      %s17 = sshll.u32 [#allocation2], 4
      %s18 = int_to_ptr.vmem [resolvable:$true] %s17
      %20 = dma.hbm_to_vmem [thread:$0]  %s16, 64, %s18, [#allocation3]
    $region5: #{tpu_custom_call.1} parent=1 // pred_fallthru
      _
    // Predicated region
    $region6: #{tpu_custom_call.1} parent=1 // pred_check
      _
    $region7: #{tpu_custom_call.1} parent=1 // pred_check_branch
      %22 = sbr.rel (0) target = $region9
    $region8: #{tpu_custom_call.1} parent=1 // pred_region
      %24 = vsyncadd [#allocation6], 0
      %s25 = sshll.u32 %s1, 4
      %s26 = int_to_ptr.hbm [resolvable:$true] %s25
      %s27 = sshll.u32 [#allocation5], 4
      %s28 = int_to_ptr.vmem [resolvable:$true] %s27
      %33 = dma.hbm_to_vmem [thread:$0]  %s26, 512, %s28, [#allocation6], 64, 64, 4
    $region9: #{tpu_custom_call.1} parent=1 // pred_fallthru
      _
    // Predicated region
    $region10: #{tpu_custom_call.1} parent=1 // pred_check
      _
    $region11: #{tpu_custom_call.1} parent=1 // pred_check_branch
      %35 = sbr.rel (0) target = $region13
    $region12: #{tpu_custom_call.1} parent=1 // pred_region
      %37 = dma.done [#allocation3], 64
    $region13: #{tpu_custom_call.1} parent=1 // pred_fallthru
      _
    // Predicated region
    $region14: #{tpu_custom_call.1} parent=1 // pred_check
      _
    $region15: #{tpu_custom_call.1} parent=1 // pred_check_branch
      %39 = sbr.rel (0) target = $region17
    $region16: #{tpu_custom_call.1} parent=1 // pred_region
      %41 = dma.done [#allocation6], 512
    $region17: #{tpu_custom_call.1} parent=1 // pred_fallthru
      _
    %v43 = vld [vmem:[#allocation2] sm:$0xf]
    %v44 = vld [vmem:[#allocation5] sm:$0xf]
    %v45 = vld [vmem:[#allocation5 + $0x4] sm:$0xf]
    %v46 = vld [vmem:[#allocation5 + $0x8] sm:$0xf]
    %v47 = vld [vmem:[#allocation5 + $0xc] sm:$0xf]
    %v48 = vld [vmem:[#allocation5 + $0x10] sm:$0xf]
    %v49 = vld [vmem:[#allocation5 + $0x14] sm:$0xf]
    %v50 = vld [vmem:[#allocation5 + $0x18] sm:$0xf]
    %v51 = vld [vmem:[#allocation5 + $0x1c] sm:$0xf]
    %v60 = vunpack.c.l.b16 %v44
    %v61 = vunpack.c.l.b16 %v45
    %v62 = vunpack.c.l.b16 %v46
    %v63 = vunpack.c.l.b16 %v47
    %v64 = vunpack.c.l.b16 %v48
    %v65 = vunpack.c.l.b16 %v49
    %v66 = vunpack.c.l.b16 %v50
    %v67 = vunpack.c.l.b16 %v51
    %v68 = vpack.c.b16 %v61, %v60
    %v69 = vpack.c.b16 %v63, %v62
    %v70 = vpack.c.b16 %v65, %v64
    %v71 = vpack.c.b16 %v67, %v66
    %vm76 = vcmask 523264
    %v78 = vsel %vm76, %v43, 0
    %80 = vmatpush.bf16.msra.mxu0 0
    %81 = vmatpush.bf16.msra.mxu0 0
    %82 = vmatpush.bf16.msra.mxu0 0
    %83 = vmatpush.bf16.msra.mxu0 0
    %84 = vmatpush.bf16.msra.mxu0 %v71
    %85 = vmatpush.bf16.msra.mxu0 %v70
    %86 = vmatpush.bf16.msra.mxu0 %v69
    %87 = vmatpush.bf16.msra.mxu0 %v68
    %88 = vmatmul.bf16.gmra.mxu0 %v78
    %v89 = vpop.f32.mrf.mxu0
    %v90 = vadd.f32 0.0, %v89
    %v91 = vpop.f32.mrf.mxu0
    %92 = vdwg.mxu0
    %93 = vst [vmem:[#allocation7] sm:$0xff] %v90
    // Predicated region
    $region18: #{tpu_custom_call.1} parent=1 // pred_check
      _
    $region19: #{tpu_custom_call.1} parent=1 // pred_check_branch
      %95 = sbr.rel (0) target = $region21
    $region20: #{tpu_custom_call.1} parent=1 // pred_region
      %97 = vsyncadd [#allocation4], 0
      %s99 = sshll.u32 [#allocation7], 4
      %s100 = int_to_ptr.vmem [resolvable:$true] %s99
      %s101 = sshll.u32 %s2, 4
      %s102 = int_to_ptr.hbm [resolvable:$true] %s101
      %104 = dma.vmem_to_hbm [thread:$0]  %s100, 128, %s102, [#allocation4]
    $region21: #{tpu_custom_call.1} parent=1 // pred_fallthru
      _
    // Predicated region
    $region22: #{tpu_custom_call.1} parent=1 // pred_check
      _
    $region23: #{tpu_custom_call.1} parent=1 // pred_check_branch
      %106 = sbr.rel (0) target = $region25
    $region24: #{tpu_custom_call.1} parent=1 // pred_region
      %108 = dma.done [#allocation4], 128
    $region25: #{tpu_custom_call.1} parent=1 // pred_fallthru
      _
    %109 = vsyncpa [#allocation3], 1
    %110 = vsyncpa [#allocation6], 1
    %111 = vsyncpa [#allocation4], 1

</llo_original>
